<compile_context>
chip_gen: v6e
topology: v6e:2x2x1
jax: 0.10.0
libtpu: 0.0.40
codegen_flags: <defaults>
</compile_context>

<pallas_src>
import jax
import jax.numpy as jnp
from jax.experimental import pallas as pl
from jax.experimental.pallas import tpu as pltpu

_NCORES = 2          # outer parallel split (v7x has 2 TCs; harmless on v5e/v6e)
_OUT_SUB = 8         # per-core output block = one f32 vreg (8, 128): lane-dense store
_OUT_LANE = 128


def _tv_kernel(x_ref, h_out_ref, w_out_ref, acc_h_ref, acc_w_ref):
    # Zero the per-core accumulators at the start of each parallel slice.
    @pl.when(pl.program_id(1) == 0)
    def _init():
        acc_h_ref[...] = jnp.zeros_like(acc_h_ref)
        acc_w_ref[...] = jnp.zeros_like(acc_w_ref)

    tb, hh, ww = x_ref.shape

    # Forward differences via static ref slices (direct offset loads).
    top = x_ref[:, 1:hh, :].astype(jnp.float32)        # (TB, H-1, W)
    bot = x_ref[:, 0:hh - 1, :].astype(jnp.float32)    # (TB, H-1, W)
    dh = top - bot
    rgt = x_ref[:, :, 1:ww].astype(jnp.float32)        # (TB, H, W-1)
    lft = x_ref[:, :, 0:ww - 1].astype(jnp.float32)    # (TB, H, W-1)
    dw = rgt - lft

    # Reduce only over the leading (plane) axis: elementwise VPU adds, no XLU
    # tree reduction and no masked scalar stores per step.
    acc_h_ref[...] += jnp.sum(dh * dh, axis=0)          # (H-1, W)
    acc_w_ref[...] += jnp.sum(dw * dw, axis=0)          # (H, W-1)

    # One full reduction per parallel slice, at the last step; the scalar is
    # broadcast over a lane-dense (8, 128) output block.
    @pl.when(pl.program_id(1) == pl.num_programs(1) - 1)
    def _finalize():
        h_out_ref[...] = jnp.full(
            (_OUT_SUB, _OUT_LANE), jnp.sum(acc_h_ref[...]), dtype=jnp.float32)
        w_out_ref[...] = jnp.full(
            (_OUT_SUB, _OUT_LANE), jnp.sum(acc_w_ref[...]), dtype=jnp.float32)


def tv_loss(x, tvloss_weight=1.0, target_block_bytes=8 * 1024 * 1024):
    """Pallas TPU equivalent of TVLoss(TVLoss_weight).forward(x); x is NCHW."""
    b, c, h, w = x.shape
    assert h >= 2 and w >= 2, "TV loss needs H >= 2 and W >= 2"
    n = b * c
    x_flat = x.reshape(n, h, w)

    itemsize = jnp.dtype(x.dtype).itemsize
    plane_bytes = h * w * itemsize

    # Planes per block: target a few MiB per input buffer, but never more than
    # one core's share of the planes.
    tb = max(1, target_block_bytes // max(plane_bytes, 1))
    tb = max(1, min(tb, pl.cdiv(n, _NCORES)))

    blocks_per_core = pl.cdiv(n, tb * _NCORES)
    n_padded = blocks_per_core * tb * _NCORES
    if n_padded > n:
        # Zero planes contribute exactly 0 to both partial sums.
        x_flat = jnp.pad(x_flat, ((0, n_padded - n), (0, 0), (0, 0)))

    # VMEM budget: double-buffered input blocks + the two accumulator planes.
    # Cap at 48 MiB so double-buffering survives on v7x (64 MiB physical VMEM).
    vmem_need = 2 * tb * plane_bytes + 2 * h * w * 4 + (2 << 20)
    vmem_limit = int(min(max(vmem_need, 32 << 20), 48 << 20))

    cost = pl.CostEstimate(
        flops=6 * n * h * w,
        transcendentals=0,
        bytes_accessed=n_padded * plane_bytes
        + 2 * _NCORES * _OUT_SUB * _OUT_LANE * 4,
    )

    in_map = lambda p, i: (p * blocks_per_core + i, 0, 0)
    out_map = lambda p, i: (p, 0)

    h_parts, w_parts = pl.pallas_call(
        _tv_kernel,
        out_shape=(
            jax.ShapeDtypeStruct((_NCORES * _OUT_SUB, _OUT_LANE), jnp.float32),
            jax.ShapeDtypeStruct((_NCORES * _OUT_SUB, _OUT_LANE), jnp.float32),
        ),
        grid_spec=pltpu.PrefetchScalarGridSpec(
            num_scalar_prefetch=0,
            grid=(_NCORES, blocks_per_core),
            in_specs=[pl.BlockSpec((tb, h, w), in_map)],
            out_specs=(
                pl.BlockSpec((_OUT_SUB, _OUT_LANE), out_map),
                pl.BlockSpec((_OUT_SUB, _OUT_LANE), out_map),
            ),
            scratch_shapes=[
                pltpu.VMEM((h - 1, w), jnp.float32),
                pltpu.VMEM((h, w - 1), jnp.float32),
            ],
        ),
        compiler_params=pltpu.CompilerParams(
            dimension_semantics=("parallel", "arbitrary"),
            vmem_limit_bytes=vmem_limit,
        ),
        cost_estimate=cost,
    )(x_flat)

    # Each core's partial lives at row p*_OUT_SUB (block is a broadcast of the
    # scalar); read one representative element per core and sum.
    h_tv = jnp.sum(h_parts[::_OUT_SUB, 0])
    w_tv = jnp.sum(w_parts[::_OUT_SUB, 0])

    # Normalization exactly as in the PyTorch module.
    count_h = c * (h - 1) * w
    count_w = c * h * (w - 1)
    return tvloss_weight * 2.0 * (h_tv / count_h + w_tv / count_w) / b


if __name__ == "__main__":
    key = jax.random.PRNGKey(0)
    x = jax.random.normal(key, (2, 4, 16, 16), dtype=jnp.float32)

    out = tv_loss(x, tvloss_weight=1.0)
    out = jax.block_until_ready(out)

    # Cross-check against a plain-JAX reference of the same formula.
    h_tv_ref = jnp.sum((x[:, :, 1:, :] - x[:, :, :-1, :]) ** 2)
    w_tv_ref = jnp.sum((x[:, :, :, 1:] - x[:, :, :, :-1]) ** 2)
    count_h = x.shape[1] * (x.shape[2] - 1) * x.shape[3]
    count_w = x.shape[1] * x.shape[2] * (x.shape[3] - 1)
    ref = 1.0 * 2.0 * (h_tv_ref / count_h + w_tv_ref / count_w) / x.shape[0]

    assert jnp.allclose(out, ref, rtol=1e-5, atol=1e-5), (out, ref)
    print("KERNEL_OK")
</pallas_src>

<mosaic_0001>
module attributes {stable_mosaic.version = 11 : i64} {
  func.func @_tv_kernel(%arg0: i32, %arg1: i32, %arg2: memref<4x16x16xf32, #tpu.memory_space<vmem>>, %arg3: memref<8x128xf32, #tpu.memory_space<vmem>>, %arg4: memref<8x128xf32, #tpu.memory_space<vmem>>, %arg5: memref<15x16xf32, #tpu.memory_space<vmem>>, %arg6: memref<16x15xf32, #tpu.memory_space<vmem>>) attributes {dimension_semantics = [#tpu.dimension_semantics<parallel>, #tpu.dimension_semantics<arbitrary>], iteration_bounds = array<i64: 2, 1>, scalar_prefetch = 0 : i64, scratch_operands = 2 : i64, tpu.core_type = #tpu.core_type<tc>, window_params = [{transform_indices = @transform_0, window_bounds = array<i64: 4, 16, 16>}, {transform_indices = @transform_1, window_bounds = array<i64: 8, 128>}, {transform_indices = @transform_2, window_bounds = array<i64: 8, 128>}]} {
    %c0_i32 = arith.constant 0 : i32
    %0 = arith.cmpi eq, %arg1, %c0_i32 : i32
    %1 = arith.extui %0 : i1 to i32
    %c0_i32_0 = arith.constant 0 : i32
    %2 = arith.cmpi ne, %1, %c0_i32_0 : i32
    scf.if %2 {
      %cst_22 = arith.constant 0.000000e+00 : f32
      %22 = vector.broadcast %cst_22 : f32 to vector<15x16xf32>
      %c0_23 = arith.constant 0 : index
      %c0_24 = arith.constant 0 : index
      %23 = vector.load %arg5[%c0_23, %c0_24] : memref<15x16xf32, #tpu.memory_space<vmem>>, vector<15x16xf32>
      tpu.vector_store %arg5[%c0_23, %c0_24], %22 {strides = array<i32>} : memref<15x16xf32, #tpu.memory_space<vmem>>, vector<15x16xf32>,
      %cst_25 = arith.constant 0.000000e+00 : f32
      %24 = vector.broadcast %cst_25 : f32 to vector<16x15xf32>
      %c0_26 = arith.constant 0 : index
      %c0_27 = arith.constant 0 : index
      %25 = vector.load %arg6[%c0_26, %c0_27] : memref<16x15xf32, #tpu.memory_space<vmem>>, vector<16x15xf32>
      tpu.vector_store %arg6[%c0_26, %c0_27], %24 {strides = array<i32>} : memref<16x15xf32, #tpu.memory_space<vmem>>, vector<16x15xf32>,
    } else {
    }
    %c0 = arith.constant 0 : index
    %c1 = arith.constant 1 : index
    %c0_1 = arith.constant 0 : index
    %3 = vector.load %arg2[%c0, %c1, %c0_1] : memref<4x16x16xf32, #tpu.memory_space<vmem>>, vector<4x15x16xf32>
    %c0_2 = arith.constant 0 : index
    %c0_3 = arith.constant 0 : index
    %c0_4 = arith.constant 0 : index
    %4 = vector.load %arg2[%c0_2, %c0_3, %c0_4] : memref<4x16x16xf32, #tpu.memory_space<vmem>>, vector<4x15x16xf32>
    %5 = arith.subf %3, %4 : vector<4x15x16xf32>
    %c0_5 = arith.constant 0 : index
    %c0_6 = arith.constant 0 : index
    %c1_7 = arith.constant 1 : index
    %6 = vector.load %arg2[%c0_5, %c0_6, %c1_7] : memref<4x16x16xf32, #tpu.memory_space<vmem>>, vector<4x16x15xf32>
    %c0_8 = arith.constant 0 : index
    %c0_9 = arith.constant 0 : index
    %c0_10 = arith.constant 0 : index
    %7 = vector.load %arg2[%c0_8, %c0_9, %c0_10] : memref<4x16x16xf32, #tpu.memory_space<vmem>>, vector<4x16x15xf32>
    %8 = arith.subf %6, %7 : vector<4x16x15xf32>
    %c0_11 = arith.constant 0 : index
    %c0_12 = arith.constant 0 : index
    %9 = vector.load %arg5[%c0_11, %c0_12] : memref<15x16xf32, #tpu.memory_space<vmem>>, vector<15x16xf32>
    %10 = arith.mulf %5, %5 : vector<4x15x16xf32>
    %cst = arith.constant dense<0.000000e+00> : vector<15x16xf32>
    %11 = vector.multi_reduction <add>, %10, %cst [0] : vector<4x15x16xf32> to vector<15x16xf32>
    %12 = arith.addf %9, %11 : vector<15x16xf32>
    %c0_13 = arith.constant 0 : index
    %c0_14 = arith.constant 0 : index
    %13 = vector.load %arg5[%c0_13, %c0_14] : memref<15x16xf32, #tpu.memory_space<vmem>>, vector<15x16xf32>
    tpu.vector_store %arg5[%c0_13, %c0_14], %12 {strides = array<i32>} : memref<15x16xf32, #tpu.memory_space<vmem>>, vector<15x16xf32>,
    %c0_15 = arith.constant 0 : index
    %c0_16 = arith.constant 0 : index
    %14 = vector.load %arg6[%c0_15, %c0_16] : memref<16x15xf32, #tpu.memory_space<vmem>>, vector<16x15xf32>
    %15 = arith.mulf %8, %8 : vector<4x16x15xf32>
    %cst_17 = arith.constant dense<0.000000e+00> : vector<16x15xf32>
    %16 = vector.multi_reduction <add>, %15, %cst_17 [0] : vector<4x16x15xf32> to vector<16x15xf32>
    %17 = arith.addf %14, %16 : vector<16x15xf32>
    %c0_18 = arith.constant 0 : index
    %c0_19 = arith.constant 0 : index
    %18 = vector.load %arg6[%c0_18, %c0_19] : memref<16x15xf32, #tpu.memory_space<vmem>>, vector<16x15xf32>
    tpu.vector_store %arg6[%c0_18, %c0_19], %17 {strides = array<i32>} : memref<16x15xf32, #tpu.memory_space<vmem>>, vector<16x15xf32>,
    %c0_i32_20 = arith.constant 0 : i32
    %19 = arith.cmpi eq, %arg1, %c0_i32_20 : i32
    %20 = arith.extui %19 : i1 to i32
    %c0_i32_21 = arith.constant 0 : i32
    %21 = arith.cmpi ne, %20, %c0_i32_21 : i32
    scf.if %21 {
      %c0_22 = arith.constant 0 : index
      %c0_23 = arith.constant 0 : index
      %22 = vector.load %arg5[%c0_22, %c0_23] : memref<15x16xf32, #tpu.memory_space<vmem>>, vector<15x16xf32>
      %23 = vector.shape_cast %22 : vector<15x16xf32> to vector<1x15x16xf32>
      %cst_24 = arith.constant dense<0.000000e+00> : vector<1xf32>
      %24 = vector.multi_reduction <add>, %23, %cst_24 [1, 2] : vector<1x15x16xf32> to vector<1xf32>
      %25 = vector.shape_cast %24 : vector<1xf32> to vector<1x1x1xf32>
      %26 = vector.extract %25[0, 0, 0] : f32 from vector<1x1x1xf32>
      %27 = vector.broadcast %26 : f32 to vector<8x128xf32>
      %c0_25 = arith.constant 0 : index
      %c0_26 = arith.constant 0 : index
      %28 = vector.load %arg3[%c0_25, %c0_26] : memref<8x128xf32, #tpu.memory_space<vmem>>, vector<8x128xf32>
      tpu.vector_store %arg3[%c0_25, %c0_26], %27 {strides = array<i32>} : memref<8x128xf32, #tpu.memory_space<vmem>>, vector<8x128xf32>,
      %c0_27 = arith.constant 0 : index
      %c0_28 = arith.constant 0 : index
      %29 = vector.load %arg6[%c0_27, %c0_28] : memref<16x15xf32, #tpu.memory_space<vmem>>, vector<16x15xf32>
      %30 = vector.shape_cast %29 : vector<16x15xf32> to vector<1x16x15xf32>
      %cst_29 = arith.constant dense<0.000000e+00> : vector<1xf32>
      %31 = vector.multi_reduction <add>, %30, %cst_29 [1, 2] : vector<1x16x15xf32> to vector<1xf32>
      %32 = vector.shape_cast %31 : vector<1xf32> to vector<1x1x1xf32>
      %33 = vector.extract %32[0, 0, 0] : f32 from vector<1x1x1xf32>
      %34 = vector.broadcast %33 : f32 to vector<8x128xf32>
      %c0_30 = arith.constant 0 : index
      %c0_31 = arith.constant 0 : index
      %35 = vector.load %arg4[%c0_30, %c0_31] : memref<8x128xf32, #tpu.memory_space<vmem>>, vector<8x128xf32>
      tpu.vector_store %arg4[%c0_30, %c0_31], %34 {strides = array<i32>} : memref<8x128xf32, #tpu.memory_space<vmem>>, vector<8x128xf32>,
    } else {
    }
    return
  }
  func.func @transform_0(%arg0: i32, %arg1: i32) -> (i32, i32, i32) {
    %c1_i32 = arith.constant 1 : i32
    %0 = arith.muli %arg0, %c1_i32 : i32
    %1 = arith.addi %0, %arg1 : i32
    %c0_i32 = arith.constant 0 : i32
    %c0_i32_0 = arith.constant 0 : i32
    %c0_i32_1 = arith.constant 0 : i32
    return %1, %c0_i32, %c0_i32_0 : i32, i32, i32
  }
  func.func @transform_1(%arg0: i32, %arg1: i32) -> (i32, i32) {
    %c0_i32 = arith.constant 0 : i32
    %c0_i32_0 = arith.constant 0 : i32
    return %arg0, %c0_i32 : i32, i32
  }
  func.func @transform_2(%arg0: i32, %arg1: i32) -> (i32, i32) {
    %c0_i32 = arith.constant 0 : i32
    %c0_i32_0 = arith.constant 0 : i32
    return %arg0, %c0_i32 : i32, i32
  }
}

</mosaic_0001>

<llo_original>
// kernel: tpu_custom_call.1
$region0: #{tpu_custom_call.1}
  #allocation0 [shape = 'u32[]', space=smem, size = 0x4, offset = 0x4, fixed_abs, tag = 'smem constant byte address 0x4 - core index']
  #allocation1 [shape = 'u32[144,128]{1,0:T(1,128)}', space=vmem, size = 0x12000, scoped, tag = 'internal scratch']
  #allocation2 [shape = 'f32[15,16]{1,0:T(8,128)}', space=vmem, size = 0x2000, scoped, tag = 'scratch operand']
  #allocation3 [shape = 'f32[16,15]{1,0:T(8,128)}', space=vmem, size = 0x2000, scoped, tag = 'scratch operand']
  %s0 = inlined_call_operand.hbm [shape: f32[8,16,16], index: 0, kind: input, shape index: {}]
  %s1 = inlined_call_operand.hbm [shape: f32[16,128], index: 1, kind: output, shape index: {0}]
  %s2 = inlined_call_operand.hbm [shape: f32[16,128], index: 2, kind: output, shape index: {1}]
  %3 = xla_tuple %s1, %s2
  %s4 = sld [smem:[#allocation0]]
  $region57: #{tpu_custom_call.1} parent=0
    _
  %s6 = ssub.s32 1, %s4
  %s7 = scalar_select 0, %s6, %s4
  $region1: #{tpu_custom_call.1} parent=0
    #allocation4 [shape = 'u8[65536]{0}', space=vmem, size = 0x10000, scoped, tag = 'input window, operand 0']
    #allocation5 [shape = 's32[2]{0}', space=sflag, size = 0x8, scoped, tag = 'scoped memory for tpu_custom_call.1']
    #allocation6 [shape = 's32[2]{0}', space=sflag, size = 0x8, scoped, tag = 'scoped memory for tpu_custom_call.1']
    #allocation7 [shape = 'u8[8192]{0}', space=vmem, size = 0x2000, scoped, tag = 'output window, operand 0']
    #allocation8 [shape = 'u8[8192]{0}', space=vmem, size = 0x2000, scoped, tag = 'output window, operand 1']
    #allocation9 [shape = 's32[2]{0}', space=sflag, size = 0x8, scoped, tag = 'scoped memory for tpu_custom_call.1']
    %8 = vsyncpa [#allocation5], 0
    %s9 = scalar_lea.sflag [#allocation5], 1
    %10 = vsyncpa %s9, 0
    %11 = vsyncpa [#allocation6], 0
    %s12 = scalar_lea.sflag [#allocation6], 1
    %13 = vsyncpa %s12, 0
    %14 = vsyncpa [#allocation9], 0
    %s15 = scalar_lea.sflag [#allocation9], 1
    %16 = vsyncpa %s15, 0
    loop: start=0, step=1, limit=4
    $region2: #{tpu_custom_call.1} parent=1 // loop_pre_header
      _
    $region3: #{tpu_custom_call.1} parent=1 // loop_header
      %s18 = sphi 0, %s22
      %p19 = scmp.ge.s32.totalorder %s18, 4
      %s25 = sphi 0, %s37
      %s26 = sphi 0, %s33
      %s27 = sphi 0, %s25
      %s28 = sphi 0, %s26
      %s29 = sphi 0, %s27
      %s30 = sphi 0, %s28
      %s42 = sphi 0, %s44
      %s45 = sphi 0, %s42
      %s46 = sphi 0, %s45
      %s62 = sphi 0, %s46
      %s68 = sphi 0, %s70
      %s71 = sphi 0, %s68
      %s72 = sphi 0, %s71
      %s88 = sphi 0, %s72
      %s94 = sphi 0, %s96
      %s97 = sphi 0, %s94
      %s98 = sphi 0, %s97
      %s114 = sphi 0, %s98
    $region4: #{tpu_custom_call.1} parent=1 // loop_header_branch
      %21 = sbr.rel (%p19) target = $region8
    $region5: #{tpu_custom_call.1} parent=1 // loop_body
      %s23 = ssub.s32 %s18, 1
      %s24 = ssub.s32 %s18, 2
      %s31 = sadd.s32 1, %s26
      %p32 = scmp.ge.s32.totalorder %s31, 1
      %s33 = scalar_select %p32, 0, %s31
      %s34 = sadd.s32 1, %s25
      %s35 = scalar_select %p32, %s34, %s25
      %p36 = scmp.ge.s32.totalorder %s35, 2
      %s37 = scalar_select %p36, 0, %s35
      %s38 = sadd.s32 %s25, %s26
      %s39 = sadd.s32 %s37, %s33
      %s40 = ssub.s32 %s38, %s39
      %p41 = scmp.eq.s32.totalorder %s40, 0
      %s43 = sadd.s32 %s42, 1
      %s44 = scalar_select %p41, %s42, %s43
      %p47 = pneg %p41
      %p48 = scmp.eq.s32.totalorder %s18, 1
      %p49 = por %p47, %p48
      %p50 = scmp.ne.s32.totalorder %s42, %s45
      %p51 = scmp.eq.s32.totalorder %s18, 0
      %p52 = por %p50, %p51
      %p53 = scmp.ne.s32.totalorder %s42, %s45
      %p54 = scmp.eq.s32.totalorder %s23, 1
      %p55 = por %p53, %p54
      %p56 = scmp.ne.s32.totalorder %s45, %s46
      %p57 = scmp.eq.s32.totalorder %s23, 0
      %p58 = por %p56, %p57
      %p59 = scmp.ne.s32.totalorder %s45, %s46
      %p60 = scmp.eq.s32.totalorder %s24, 1
      %p61 = por %p59, %p60
      %p63 = scmp.ne.s32.totalorder %s46, %s62
      %p64 = scmp.eq.s32.totalorder %s24, 0
      %p65 = por %p63, %p64
      %s66 = ssub.s32 %s25, %s37
      %p67 = scmp.eq.s32.totalorder %s66, 0
      %s69 = sadd.s32 %s68, 1
      %s70 = scalar_select %p67, %s68, %s69
      %p73 = pneg %p67
      %p74 = scmp.eq.s32.totalorder %s18, 1
      %p75 = por %p73, %p74
      %p76 = scmp.ne.s32.totalorder %s68, %s71
      %p77 = scmp.eq.s32.totalorder %s18, 0
      %p78 = por %p76, %p77
      %p79 = scmp.ne.s32.totalorder %s68, %s71
      %p80 = scmp.eq.s32.totalorder %s23, 1
      %p81 = por %p79, %p80
      %p82 = scmp.ne.s32.totalorder %s71, %s72
      %p83 = scmp.eq.s32.totalorder %s23, 0
      %p84 = por %p82, %p83
      %p85 = scmp.ne.s32.totalorder %s71, %s72
      %p86 = scmp.eq.s32.totalorder %s24, 1
      %p87 = por %p85, %p86
      %p89 = scmp.ne.s32.totalorder %s72, %s88
      %p90 = scmp.eq.s32.totalorder %s24, 0
      %p91 = por %p89, %p90
      %s92 = ssub.s32 %s25, %s37
      %p93 = scmp.eq.s32.totalorder %s92, 0
      %s95 = sadd.s32 %s94, 1
      %s96 = scalar_select %p93, %s94, %s95
      %p99 = pneg %p93
      %p100 = scmp.eq.s32.totalorder %s18, 1
      %p101 = por %p99, %p100
      %p102 = scmp.ne.s32.totalorder %s94, %s97
      %p103 = scmp.eq.s32.totalorder %s18, 0
      %p104 = por %p102, %p103
      %p105 = scmp.ne.s32.totalorder %s94, %s97
      %p106 = scmp.eq.s32.totalorder %s23, 1
      %p107 = por %p105, %p106
      %p108 = scmp.ne.s32.totalorder %s97, %s98
      %p109 = scmp.eq.s32.totalorder %s23, 0
      %p110 = por %p108, %p109
      %p111 = scmp.ne.s32.totalorder %s97, %s98
      %p112 = scmp.eq.s32.totalorder %s24, 1
      %p113 = por %p111, %p112
      %p115 = scmp.ne.s32.totalorder %s98, %s114
      %p116 = scmp.eq.s32.totalorder %s24, 0
      %p117 = por %p115, %p116
      %p118 = scmp.le.s32.totalorder 1, %s18
      %p119 = scmp.lt.s32.totalorder %s18, 3
      %p120 = pnand %p118, %p119
      %p121 = pneg %p120
      // Predicated region
      $region9: #{tpu_custom_call.1} parent=5 // pred_check
        _
      $region10: #{tpu_custom_call.1} parent=5 // pred_check_branch
        %123 = sbr.rel (%p120) target = $region12
      $region11: #{tpu_custom_call.1} parent=5 // pred_region
        %s124 = ssub.s32 %s18, 1
      $region12: #{tpu_custom_call.1} parent=5 // pred_fallthru
        _
      %p125 = scmp.lt.s32.totalorder %s18, 2
      // Predicated region
      $region13: #{tpu_custom_call.1} parent=5 // pred_check
        %p126 = pneg %p125
      $region14: #{tpu_custom_call.1} parent=5 // pred_check_branch
        %128 = sbr.rel (%p126) target = $region16
      $region15: #{tpu_custom_call.1} parent=5 // pred_region
        // Predicated region
        $region17: #{tpu_custom_call.1} parent=15 // pred_check
          %p129 = pneg %p52
        $region18: #{tpu_custom_call.1} parent=15 // pred_check_branch
          %131 = sbr.rel (%p129) target = $region20
        $region19: #{tpu_custom_call.1} parent=15 // pred_region
          %s132 = sand.u32 %s42, 1
          %s133 = scalar_lea.sflag [#allocation5], %s132
          %s134 = sand.u32 %s42, 1
          %s135 = smul.addr %s134, 64
          %s136 = scalar_lea.vmem [#allocation4], %s135
          %s137 = sadd.s32 %s25, %s26
          %s138 = smul.u32 4, %s137
          %s140 = ssub.s32 1024, 1024
          %141 = vsyncadd %s133, %s140
          %s142 = smul.addr %s138, 2
          %s143 = smul.addr %s142, 128
          %s144 = scalar_lea.hbm %s0, %s143
          %s145 = sshll.u32 %s136, 4
          %s146 = int_to_ptr.vmem [resolvable:$true] %s145
          %151 = dma.hbm_to_vmem [thread:$0]  %s144, 1024, %s146, %s133, 128, 128, 8
        $region20: #{tpu_custom_call.1} parent=15 // pred_fallthru
          _
      $region16: #{tpu_custom_call.1} parent=5 // pred_fallthru
        _
      %p152 = scmp.le.s32.totalorder 1, %s18
      %p153 = scmp.lt.s32.totalorder %s18, 3
      %p154 = pnand %p152, %p153
      %p155 = pneg %p154
      // Predicated region
      $region21: #{tpu_custom_call.1} parent=5 // pred_check
        _
      $region22: #{tpu_custom_call.1} parent=5 // pred_check_branch
        %157 = sbr.rel (%p154) target = $region24
      $region23: #{tpu_custom_call.1} parent=5 // pred_region
        %s158 = ssub.s32 %s18, 1
        %s159 = sand.u32 %s45, 1
        %s160 = scalar_lea.sflag [#allocation5], %s159
        %s161 = sand.u32 %s45, 1
        %s162 = smul.addr %s161, 64
        %s163 = scalar_lea.vmem [#allocation4], %s162
        // Predicated region
        $region25: #{tpu_custom_call.1} parent=23 // pred_check
          %p164 = pneg %p58
        $region26: #{tpu_custom_call.1} parent=23 // pred_check_branch
          %166 = sbr.rel (%p164) target = $region28
        $region27: #{tpu_custom_call.1} parent=23 // pred_region
          %167 = dma.done %s160, 1024
        $region28: #{tpu_custom_call.1} parent=23 // pred_fallthru
          _
        %s168 = sand.u32 %s45, 1
        %s169 = scalar_lea.sflag [#allocation5], %s168
        %s170 = sand.u32 %s45, 1
        %s171 = smul.addr %s170, 64
        %s172 = scalar_lea.vmem [#allocation4], %s171
        %p173 = pneg %p58
        %p174 = pneg %p55
        %p175 = pneg %p84
        %p176 = pneg %p81
        %s177 = sand.u32 %s71, 1
        %s178 = scalar_lea.sflag [#allocation6], %s177
        %s179 = sand.u32 %s71, 1
        %s180 = smul.addr %s179, 8
        %s181 = scalar_lea.vmem [#allocation7], %s180
        %p182 = pneg %p110
        %p183 = pneg %p107
        %s184 = sand.u32 %s97, 1
        %s185 = scalar_lea.sflag [#allocation9], %s184
        %s186 = sand.u32 %s97, 1
        %s187 = smul.addr %s186, 8
        %s188 = scalar_lea.vmem [#allocation8], %s187
        %s189 = sadd.s32 %s27, %s28
        %s190 = smul.u32 4, %s189
        %p191 = scmp.eq.s32.totalorder %s28, 0
        // Predicated region
        $region29: #{tpu_custom_call.1} parent=23 // pred_check
          %p192 = pneg %p191
        $region30: #{tpu_custom_call.1} parent=23 // pred_check_branch
          %194 = sbr.rel (%p192) target = $region32
        $region31: #{tpu_custom_call.1} parent=23 // pred_region
          %vm195 = vcmask 130048
          %196 = vst.msk [vmem:[#allocation2] sm:$0xff] %vm195, 0.0
          %vm197 = vcmask 129024
          %198 = vst.msk [vmem:[#allocation2 + $0x8] sm:$0x7f] %vm197, 0.0
          %vm199 = vcmask 121856
          %200 = vst.msk [vmem:[#allocation3] sm:$0xff] %vm199, 0.0
          %201 = vst.msk [vmem:[#allocation3 + $0x8] sm:$0xff] %vm199, 0.0
        $region32: #{tpu_custom_call.1} parent=23 // pred_fallthru
          _
        %v202 = vld [vmem:[%s163 + $0x1] sm:$0xff]
        %v203 = vld [vmem:[%s163 + $0x9] sm:$0x7f]
        %v204 = vld [vmem:[%s163 + $0x11] sm:$0xff]
        %v205 = vld [vmem:[%s163 + $0x19] sm:$0x7f]
        %v206 = vld [vmem:[%s163 + $0x21] sm:$0xff]
        %v207 = vld [vmem:[%s163 + $0x29] sm:$0x7f]
        %v208 = vld [vmem:[%s163 + $0x31] sm:$0xff]
        %v209 = vld [vmem:[%s163 + $0x39] sm:$0x7f]
        %v210 = vld [vmem:[%s163] sm:$0xff]
        %v211 = vld [vmem:[%s163 + $0x8] sm:$0x7f]
        %v212 = vld [vmem:[%s163 + $0x10] sm:$0xff]
        %v213 = vld [vmem:[%s163 + $0x18] sm:$0x7f]
        %v214 = vld [vmem:[%s163 + $0x20] sm:$0xff]
        %v215 = vld [vmem:[%s163 + $0x28] sm:$0x7f]
        %v216 = vld [vmem:[%s163 + $0x30] sm:$0xff]
        %v217 = vld [vmem:[%s163 + $0x38] sm:$0x7f]
        %v218 = vsub.f32 %v202, %v210
        %v219 = vsub.f32 %v203, %v211
        %v220 = vsub.f32 %v204, %v212
        %v221 = vsub.f32 %v205, %v213
        %v222 = vsub.f32 %v206, %v214
        %v223 = vsub.f32 %v207, %v215
        %v224 = vsub.f32 %v208, %v216
        %v225 = vsub.f32 %v209, %v217
        %v226 = vld [vmem:[%s163 + $0x8] sm:$0xff]
        %v227 = vld [vmem:[%s163 + $0x18] sm:$0xff]
        %v228 = vld [vmem:[%s163 + $0x28] sm:$0xff]
        %v229 = vld [vmem:[%s163 + $0x38] sm:$0xff]
        %238 = vrot.lane.b32.xlu0 %v210, 1
        %v239 = vpop.permute.xlu0 %238
        %240 = vrot.lane.b32.xlu0 %v226, 1
        %v241 = vpop.permute.xlu0 %240
        %242 = vrot.lane.b32.xlu0 %v212, 1
        %v243 = vpop.permute.xlu0 %242
        %244 = vrot.lane.b32.xlu0 %v227, 1
        %v245 = vpop.permute.xlu0 %244
        %246 = vrot.lane.b32.xlu0 %v214, 1
        %v247 = vpop.permute.xlu0 %246
        %248 = vrot.lane.b32.xlu0 %v228, 1
        %v249 = vpop.permute.xlu0 %248
        %250 = vrot.lane.b32.xlu0 %v216, 1
        %v251 = vpop.permute.xlu0 %250
        %252 = vrot.lane.b32.xlu0 %v229, 1
        %v253 = vpop.permute.xlu0 %252
        %v262 = vsub.f32 %v210, %v239
        %v263 = vsub.f32 %v226, %v241
        %v264 = vsub.f32 %v212, %v243
        %v265 = vsub.f32 %v227, %v245
        %v266 = vsub.f32 %v214, %v247
        %v267 = vsub.f32 %v228, %v249
        %v268 = vsub.f32 %v216, %v251
        %v269 = vsub.f32 %v229, %v253
        %v270 = vld [vmem:[#allocation2] sm:$0xff]
        %v271 = vld [vmem:[#allocation2 + $0x8] sm:$0x7f]
        %v272 = vmul.f32 %v218, %v218
        %v273 = vmul.f32 %v219, %v219
        %v274 = vmul.f32 %v220, %v220
        %v275 = vmul.f32 %v221, %v221
        %v276 = vmul.f32 %v222, %v222
        %v277 = vmul.f32 %v223, %v223
        %v278 = vmul.f32 %v224, %v224
        %v279 = vmul.f32 %v225, %v225
        %vm280 = vcmask 130048
        %v281 = vsel %vm280, %v272, 0.0
        %v282 = vsel %vm280, %v274, 0.0
        %v283 = vadd.f32 %v281, %v282
        %v284 = vsel %vm280, %v276, 0.0
        %v285 = vadd.f32 %v283, %v284
        %v286 = vsel %vm280, %v278, 0.0
        %v287 = vadd.f32 %v285, %v286
        %vm288 = vcmask 129024
        %v289 = vsel %vm288, %v273, 0.0
        %v290 = vsel %vm288, %v275, 0.0
        %v291 = vadd.f32 %v289, %v290
        %v292 = vsel %vm288, %v277, 0.0
        %v293 = vadd.f32 %v291, %v292
        %v294 = vsel %vm288, %v279, 0.0
        %v295 = vadd.f32 %v293, %v294
        %v296 = vadd.f32 %v270, %v287
        %v297 = vadd.f32 %v271, %v295
        %298 = vst.msk [vmem:[#allocation2] sm:$0xff] %vm280, %v296
        %299 = vst.msk [vmem:[#allocation2 + $0x8] sm:$0x7f] %vm288, %v297
        %v300 = vld [vmem:[#allocation3] sm:$0xff]
        %v301 = vld [vmem:[#allocation3 + $0x8] sm:$0xff]
        %v302 = vmul.f32 %v262, %v262
        %v303 = vmul.f32 %v263, %v263
        %v304 = vmul.f32 %v264, %v264
        %v305 = vmul.f32 %v265, %v265
        %v306 = vmul.f32 %v266, %v266
        %v307 = vmul.f32 %v267, %v267
        %v308 = vmul.f32 %v268, %v268
        %v309 = vmul.f32 %v269, %v269
        %vm310 = vcmask 130056
        %v311 = vsel %vm310, %v302, 0.0
        %v312 = vsel %vm310, %v304, 0.0
        %v313 = vadd.f32 %v311, %v312
        %v314 = vsel %vm310, %v306, 0.0
        %v315 = vadd.f32 %v313, %v314
        %v316 = vsel %vm310, %v308, 0.0
        %v317 = vadd.f32 %v315, %v316
        %v318 = vsel %vm310, %v303, 0.0
        %v319 = vsel %vm310, %v305, 0.0
        %v320 = vadd.f32 %v318, %v319
        %v321 = vsel %vm310, %v307, 0.0
        %v322 = vadd.f32 %v320, %v321
        %v323 = vsel %vm310, %v309, 0.0
        %v324 = vadd.f32 %v322, %v323
        %327 = vrot.lane.b32.xlu0 %v317, 127
        %v328 = vpop.permute.xlu0 %327
        %329 = vrot.lane.b32.xlu0 %v324, 127
        %v330 = vpop.permute.xlu0 %329
        %v333 = vadd.f32 %v300, %v328
        %v334 = vadd.f32 %v301, %v330
        %vm335 = vcmask 121856
        %336 = vst.msk [vmem:[#allocation3] sm:$0xff] %vm335, %v333
        %337 = vst.msk [vmem:[#allocation3 + $0x8] sm:$0xff] %vm335, %v334
        // Predicated region
        $region33: #{tpu_custom_call.1} parent=23 // pred_check
          %p338 = pneg %p191
        $region34: #{tpu_custom_call.1} parent=23 // pred_check_branch
          %340 = sbr.rel (%p338) target = $region36
        $region35: #{tpu_custom_call.1} parent=23 // pred_region
          %v341 = vld [vmem:[#allocation2] sm:$0xff]
          %v342 = vld [vmem:[#allocation2 + $0x8] sm:$0x7f]
          %v343 = vsel %vm280, %v341, 0.0
          %v344 = vsel %vm288, %v342, 0.0
          %v345 = vadd.f32 %v343, %v344
          %346 = vadd.xlane.f32.xlu0 %v345
          %v347 = vpop.xlane.xlu0 %346
          %v348 = vrot.slane %v347, 4
          %v349 = vadd.f32 %v347, %v348
          %v350 = vrot.slane %v349, 2
          %v351 = vadd.f32 %v349, %v350
          %v352 = vrot.slane %v351, 1
          %v353 = vadd.f32 %v351, %v352
          %s354 = vtos %v353
          %v355 = vstv %s354
          %356 = vst [vmem:[%s181] sm:$0xff] %v355
          %v357 = vld [vmem:[#allocation3] sm:$0xff]
          %v358 = vld [vmem:[#allocation3 + $0x8] sm:$0xff]
          %v359 = vsel %vm335, %v357, 0.0
          %v360 = vsel %vm335, %v358, 0.0
          %v361 = vadd.f32 %v359, %v360
          %362 = vadd.xlane.f32.xlu0 %v361
          %v363 = vpop.xlane.xlu0 %362
          %v364 = vrot.slane %v363, 4
          %v365 = vadd.f32 %v363, %v364
          %v366 = vrot.slane %v365, 2
          %v367 = vadd.f32 %v365, %v366
          %v368 = vrot.slane %v367, 1
          %v369 = vadd.f32 %v367, %v368
          %s370 = vtos %v369
          %v371 = vstv %s370
          %372 = vst [vmem:[%s188] sm:$0xff] %v371
        $region36: #{tpu_custom_call.1} parent=23 // pred_fallthru
          _
        %s373 = sand.u32 %s71, 1
        %s374 = scalar_lea.sflag [#allocation6], %s373
        %s375 = sand.u32 %s71, 1
        %s376 = smul.addr %s375, 8
        %s377 = scalar_lea.vmem [#allocation7], %s376
        %s378 = sand.u32 %s97, 1
        %s379 = scalar_lea.sflag [#allocation9], %s378
        %s380 = sand.u32 %s97, 1
        %s381 = smul.addr %s380, 8
        %s382 = scalar_lea.vmem [#allocation8], %s381
        // Predicated region
        $region37: #{tpu_custom_call.1} parent=23 // pred_check
          %p383 = pneg %p81
        $region38: #{tpu_custom_call.1} parent=23 // pred_check_branch
          %385 = sbr.rel (%p383) target = $region40
        $region39: #{tpu_custom_call.1} parent=23 // pred_region
          %s387 = ssub.s32 128, 128
          %388 = vsyncadd %s374, %s387
          %s389 = smul.addr %s27, 128
          %s390 = scalar_lea.hbm %s1, %s389
          %s392 = sshll.u32 %s377, 4
          %s393 = int_to_ptr.vmem [resolvable:$true] %s392
          %395 = dma.vmem_to_hbm [thread:$0]  %s393, 128, %s390, %s374
        $region40: #{tpu_custom_call.1} parent=23 // pred_fallthru
          _
        // Predicated region
        $region41: #{tpu_custom_call.1} parent=23 // pred_check
          %p396 = pneg %p107
        $region42: #{tpu_custom_call.1} parent=23 // pred_check_branch
          %398 = sbr.rel (%p396) target = $region44
        $region43: #{tpu_custom_call.1} parent=23 // pred_region
          %s400 = ssub.s32 128, 128
          %401 = vsyncadd %s379, %s400
          %s402 = smul.addr %s27, 128
          %s403 = scalar_lea.hbm %s2, %s402
          %s405 = sshll.u32 %s382, 4
          %s406 = int_to_ptr.vmem [resolvable:$true] %s405
          %408 = dma.vmem_to_hbm [thread:$0]  %s406, 128, %s403, %s379
        $region44: #{tpu_custom_call.1} parent=23 // pred_fallthru
          _
      $region24: #{tpu_custom_call.1} parent=5 // pred_fallthru
        _
      %p409 = scmp.le.s32.totalorder 2, %s18
      // Predicated region
      $region45: #{tpu_custom_call.1} parent=5 // pred_check
        %p410 = pneg %p409
      $region46: #{tpu_custom_call.1} parent=5 // pred_check_branch
        %412 = sbr.rel (%p410) target = $region48
      $region47: #{tpu_custom_call.1} parent=5 // pred_region
        %s413 = ssub.s32 %s18, 2
        // Predicated region
        $region49: #{tpu_custom_call.1} parent=47 // pred_check
          %p414 = pneg %p87
        $region50: #{tpu_custom_call.1} parent=47 // pred_check_branch
          %416 = sbr.rel (%p414) target = $region52
        $region51: #{tpu_custom_call.1} parent=47 // pred_region
          %s417 = sand.u32 %s72, 1
          %s418 = scalar_lea.sflag [#allocation6], %s417
          %s419 = sand.u32 %s72, 1
          %s420 = smul.addr %s419, 8
          %s421 = scalar_lea.vmem [#allocation7], %s420
          %422 = dma.done %s418, 128
        $region52: #{tpu_custom_call.1} parent=47 // pred_fallthru
          _
        // Predicated region
        $region53: #{tpu_custom_call.1} parent=47 // pred_check
          %p423 = pneg %p113
        $region54: #{tpu_custom_call.1} parent=47 // pred_check_branch
          %425 = sbr.rel (%p423) target = $region56
        $region55: #{tpu_custom_call.1} parent=47 // pred_region
          %s426 = sand.u32 %s98, 1
          %s427 = scalar_lea.sflag [#allocation9], %s426
          %s428 = sand.u32 %s98, 1
          %s429 = smul.addr %s428, 8
          %s430 = scalar_lea.vmem [#allocation8], %s429
          %431 = dma.done %s427, 128
        $region56: #{tpu_custom_call.1} parent=47 // pred_fallthru
          _
      $region48: #{tpu_custom_call.1} parent=5 // pred_fallthru
        _
    $region6: #{tpu_custom_call.1} parent=1 // loop_footer
      %s22 = sadd.s32 1, %s18
    $region7: #{tpu_custom_call.1} parent=1 // loop_footer_branch
      %17 = sbr.rel target = $region3
    $region8: #{tpu_custom_call.1} parent=1 // loop_exit
      _
    %432 = vsyncpa [#allocation5], 1
    %s433 = scalar_lea.sflag [#allocation5], 1
    %434 = vsyncpa %s433, 1
    %435 = vsyncpa [#allocation6], 1
    %s436 = scalar_lea.sflag [#allocation6], 1
    %437 = vsyncpa %s436, 1
    %438 = vsyncpa [#allocation9], 1
    %s439 = scalar_lea.sflag [#allocation9], 1
    %440 = vsyncpa %s439, 1

</llo_original>
